<compile_context>
chip_gen: v6e
topology: v6e:2x2x1
jax: 0.10.0
libtpu: 0.0.40
codegen_flags: <defaults>
</compile_context>

<pallas_src>
import jax
import jax.numpy as jnp
from jax.experimental import pallas as pl
from jax.experimental.pallas import tpu as pltpu


def _round_up(x, m):
    return ((x + m - 1) // m) * m


def _tpu_vmem_capacity_bytes():
    # Trace-time hardware query; conservative fallback = v7x per-core VMEM.
    try:
        return int(pltpu.get_tpu_info().vmem_capacity_bytes)
    except Exception:
        return 64 * 1024 * 1024


# ----------------------------------------------------------------------------
# Kernels
# ----------------------------------------------------------------------------
def ffn_kernel_fused(x_ref, w1_ref, b1_ref, w2_ref, b2_ref, o_ref):
    """Single hidden slab (no reduction over k): write output directly."""
    h = jnp.dot(x_ref[...], w1_ref[...], preferred_element_type=jnp.float32)
    h = jnp.maximum(h + b1_ref[...], 0.0)            # bias + ReLU (f32 epilogue)
    # Dropout (inference/eval) == identity.
    h_lhs = h if x_ref.dtype == jnp.float32 else h.astype(x_ref.dtype)
    o_ref[...] = (
        jnp.dot(h_lhs, w2_ref[...], preferred_element_type=jnp.float32)
        + b2_ref[...]
    ).astype(o_ref.dtype)


def ffn_kernel_reduce(x_ref, w1_ref, b1_ref, w2_ref, b2_ref, o_ref, acc_ref):
    """Hidden dim streamed in slabs: f32 VMEM accumulator over grid axis 1."""
    k = pl.program_id(1)

    @pl.when(k == 0)
    def _():
        acc_ref[...] = jnp.zeros_like(acc_ref)

    h = jnp.dot(x_ref[...], w1_ref[...], preferred_element_type=jnp.float32)
    h = jnp.maximum(h + b1_ref[...], 0.0)            # bias + ReLU
    # Dropout (inference/eval) == identity.
    h_lhs = h if x_ref.dtype == jnp.float32 else h.astype(x_ref.dtype)
    acc_ref[...] += jnp.dot(h_lhs, w2_ref[...], preferred_element_type=jnp.float32)

    @pl.when(k == pl.num_programs(1) - 1)
    def _():
        o_ref[...] = (acc_ref[...] + b2_ref[...]).astype(o_ref.dtype)


# ----------------------------------------------------------------------------
# Wrapper
# ----------------------------------------------------------------------------
def feed_forward(x, w1, b1, w2, b2, *, tm=None, tf=None):
    """x: (B, S, D). w1: (D, F), b1: (F,), w2: (F, D), b2: (D,).

    Weights are stored (in, out), i.e. pre-transposed vs. torch nn.Linear's
    (out, in) layout, so the kernel computes y = x @ W + b on the MXU.
    """
    B, S, D = x.shape
    F = w1.shape[1]
    M = B * S
    itemsize = jnp.dtype(x.dtype).itemsize

    # ---- generation-aware tile / VMEM-budget selection ----------------------
    vmem_cap = _tpu_vmem_capacity_bytes()
    vmem_limit = int(min(vmem_cap, 128 * 1024 * 1024) * 0.8)
    if vmem_cap >= 96 * 1024 * 1024:
        # v5e / v6e (128 MiB VMEM): big row tiles to push AI past the compute
        # ridge (~240 / ~680 flops/byte); keep tm a multiple of 256 for the
        # v6e 2x256x256 MXU geometry.
        tm_target = 1024 if itemsize <= 2 else 512
    else:
        # v7x (64 MiB VMEM per TensorCore): smaller tiles, still past the
        # ~310 flops/byte ridge.
        tm_target = 512
    tf_target = 512

    # Hidden (reduction) tile: prefer a 128-multiple divisor of F so the
    # weights are never padded/copied per call.
    if tf is None:
        if F <= tf_target:
            tf = F
        else:
            tf = None
            for cand in range(tf_target, 127, -128):
                if F % cand == 0:
                    tf = cand
                    break
            if tf is None:
                tf = tf_target
    F_pad = _round_up(F, tf)

    if tm is None:
        tm = tm_target

        def _working_set(tm_):
            return (2 * tm_ * D * itemsize        # x tile (double-buffered)
                    + 2 * D * tf * itemsize       # W1 slab (double-buffered)
                    + 2 * tf * D * itemsize       # W2 slab (double-buffered)
                    + tm_ * D * 4                 # f32 accumulator scratch
                    + 2 * tm_ * D * itemsize      # output tile (double-buffered)
                    + 2 * (tf + D) * itemsize)    # biases

        while tm > 128 and _working_set(tm) > int(0.8 * vmem_limit):
            tm //= 2
    tm = min(tm, _round_up(M, 8))     # don't over-pad tiny inputs
    M_pad = _round_up(M, tm)

    # ---- operand prep --------------------------------------------------------
    x2 = x.reshape(M, D)
    if M_pad != M:
        x2 = jnp.pad(x2, ((0, M_pad - M), (0, 0)))

    if F_pad != F:
        # Exact fallback only (F has no 128-multiple divisor <= tf_target):
        # relu(x@0 + 0) = 0 and zero rows of W2 contribute nothing.
        # TODO(synk): pre-pad weights once at parameter init to avoid this
        # per-call O(D*F) HBM copy.
        w1 = jnp.pad(w1, ((0, 0), (0, F_pad - F)))
        b1 = jnp.pad(b1, ((0, F_pad - F),))
        w2 = jnp.pad(w2, ((0, F_pad - F), (0, 0)))

    b1_2 = b1.reshape(1, F_pad)
    b2_2 = b2.reshape(1, D)

    n_row_tiles = M_pad // tm
    n_k = F_pad // tf

    # Truthful traffic estimate: x + out once, weight slabs re-streamed once
    # per row tile; f32 intermediate never hits HBM.
    cost = pl.CostEstimate(
        flops=4 * M * D * F,
        bytes_accessed=(2 * M * D * itemsize
                        + n_row_tiles * (2 * D * F_pad + F_pad + D) * itemsize),
        transcendentals=0,
    )

    if n_k == 1:
        out = pl.pallas_call(
            ffn_kernel_fused,
            out_shape=jax.ShapeDtypeStruct((M_pad, D), x.dtype),
            grid_spec=pltpu.PrefetchScalarGridSpec(
                num_scalar_prefetch=0,
                grid=(n_row_tiles,),
                in_specs=[
                    pl.BlockSpec((tm, D), lambda i: (i, 0)),       # x row tile
                    pl.BlockSpec((D, F_pad), lambda i: (0, 0)),    # W1 (resident)
                    pl.BlockSpec((1, F_pad), lambda i: (0, 0)),    # b1
                    pl.BlockSpec((F_pad, D), lambda i: (0, 0)),    # W2 (resident)
                    pl.BlockSpec((1, D), lambda i: (0, 0)),        # b2
                ],
                out_specs=pl.BlockSpec((tm, D), lambda i: (i, 0)),
            ),
            compiler_params=pltpu.CompilerParams(
                dimension_semantics=("parallel",),
                vmem_limit_bytes=vmem_limit,
            ),
            cost_estimate=cost,
        )(x2, w1, b1_2, w2, b2_2)
    else:
        out = pl.pallas_call(
            ffn_kernel_reduce,
            out_shape=jax.ShapeDtypeStruct((M_pad, D), x.dtype),
            grid_spec=pltpu.PrefetchScalarGridSpec(
                num_scalar_prefetch=0,
                grid=(n_row_tiles, n_k),
                in_specs=[
                    pl.BlockSpec((tm, D), lambda i, k: (i, 0)),    # x row tile
                    pl.BlockSpec((D, tf), lambda i, k: (0, k)),    # W1 column slab
                    pl.BlockSpec((1, tf), lambda i, k: (0, k)),    # b1 slab
                    pl.BlockSpec((tf, D), lambda i, k: (k, 0)),    # W2 row slab
                    pl.BlockSpec((1, D), lambda i, k: (0, 0)),     # b2 (invariant)
                ],
                out_specs=pl.BlockSpec((tm, D), lambda i, k: (i, 0)),
                scratch_shapes=[pltpu.VMEM((tm, D), jnp.float32)],  # f32 acc
            ),
            compiler_params=pltpu.CompilerParams(
                dimension_semantics=("parallel", "arbitrary"),
                vmem_limit_bytes=vmem_limit,
            ),
            cost_estimate=cost,
        )(x2, w1, b1_2, w2, b2_2)

    return out[:M].reshape(B, S, D)


def reference_ffn(x, w1, b1, w2, b2):
    h = jnp.maximum(jnp.einsum("bsd,df->bsf", x, w1) + b1, 0.0)
    return jnp.einsum("bsf,fd->bsd", h, w2) + b2


if __name__ == "__main__":
    key = jax.random.PRNGKey(0)

    # --- Case 1: small shapes consistent with the module (fused single-slab path)
    B, S, D, F = 2, 8, 32, 64
    kx, kw1, kb1, kw2, kb2, kx2, kw1b, kb1b, kw2b = jax.random.split(key, 9)

    x = jax.random.normal(kx, (B, S, D), dtype=jnp.float32)
    w1 = jax.random.normal(kw1, (D, F), dtype=jnp.float32) * (1.0 / D) ** 0.5
    b1 = jax.random.normal(kb1, (F,), dtype=jnp.float32) * 0.01
    w2 = jax.random.normal(kw2, (F, D), dtype=jnp.float32) * (1.0 / F) ** 0.5
    b2 = jax.random.normal(kb2, (D,), dtype=jnp.float32) * 0.01

    out = jax.block_until_ready(feed_forward(x, w1, b1, w2, b2))
    ref = reference_ffn(x, w1, b1, w2, b2)
    assert out.shape == (B, S, D)
    assert jnp.allclose(out, ref, atol=1e-4, rtol=1e-4)

    # --- Case 2: larger hidden dim with explicit tf to exercise the k-reduction path
    F2 = 256
    x_b = jax.random.normal(kx2, (B, S, D), dtype=jnp.float32)
    w1_b = jax.random.normal(kw1b, (D, F2), dtype=jnp.float32) * (1.0 / D) ** 0.5
    b1_b = jax.random.normal(kb1b, (F2,), dtype=jnp.float32) * 0.01
    w2_b = jax.random.normal(kw2b, (F2, D), dtype=jnp.float32) * (1.0 / F2) ** 0.5
    b2_b = b2

    out_b = jax.block_until_ready(
        feed_forward(x_b, w1_b, b1_b, w2_b, b2_b, tf=128))
    ref_b = reference_ffn(x_b, w1_b, b1_b, w2_b, b2_b)
    assert out_b.shape == (B, S, D)
    assert jnp.allclose(out_b, ref_b, atol=1e-4, rtol=1e-4)

    print("KERNEL_OK")
</pallas_src>

<mosaic_0001>
module attributes {stable_mosaic.version = 11 : i64} {
  func.func @ffn_kernel_fused(%arg0: i32, %arg1: memref<16x32xf32, #tpu.memory_space<vmem>>, %arg2: memref<32x64xf32, #tpu.memory_space<vmem>>, %arg3: memref<1x64xf32, #tpu.memory_space<vmem>>, %arg4: memref<64x32xf32, #tpu.memory_space<vmem>>, %arg5: memref<1x32xf32, #tpu.memory_space<vmem>>, %arg6: memref<16x32xf32, #tpu.memory_space<vmem>>) attributes {dimension_semantics = [#tpu.dimension_semantics<parallel>], iteration_bounds = array<i64: 1>, scalar_prefetch = 0 : i64, scratch_operands = 0 : i64, tpu.core_type = #tpu.core_type<tc>, window_params = [{transform_indices = @transform_0, window_bounds = array<i64: 16, 32>}, {pipeline_mode = #tpu.pipeline_mode<synchronous>, transform_indices = @transform_1, window_bounds = array<i64: 32, 64>}, {pipeline_mode = #tpu.pipeline_mode<synchronous>, transform_indices = @transform_2, window_bounds = array<i64: 1, 64>}, {pipeline_mode = #tpu.pipeline_mode<synchronous>, transform_indices = @transform_3, window_bounds = array<i64: 64, 32>}, {pipeline_mode = #tpu.pipeline_mode<synchronous>, transform_indices = @transform_4, window_bounds = array<i64: 1, 32>}, {transform_indices = @transform_5, window_bounds = array<i64: 16, 32>}]} {
    %c0 = arith.constant 0 : index
    %c0_0 = arith.constant 0 : index
    %0 = vector.load %arg1[%c0, %c0_0] : memref<16x32xf32, #tpu.memory_space<vmem>>, vector<16x32xf32>
    %c0_1 = arith.constant 0 : index
    %c0_2 = arith.constant 0 : index
    %1 = vector.load %arg2[%c0_1, %c0_2] : memref<32x64xf32, #tpu.memory_space<vmem>>, vector<32x64xf32>
    %cst = arith.constant dense<0.000000e+00> : vector<16x64xf32>
    %2 = tpu.matmul %0, %1, %cst {dimension_numbers = #tpu.dot_dimension_numbers<[1], [0], [0], [1], [0, 0, 1, 1], [], []>} : vector<16x32xf32>, vector<32x64xf32>, vector<16x64xf32> -> vector<16x64xf32>
    %c0_3 = arith.constant 0 : index
    %c0_4 = arith.constant 0 : index
    %3 = vector.load %arg3[%c0_3, %c0_4] : memref<1x64xf32, #tpu.memory_space<vmem>>, vector<1x64xf32>
    %4 = vector.broadcast %3 : vector<1x64xf32> to vector<16x64xf32>
    %5 = arith.addf %2, %4 : vector<16x64xf32>
    %cst_5 = arith.constant 0.000000e+00 : f32
    %6 = vector.broadcast %cst_5 : f32 to vector<16x64xf32>
    %7 = arith.maximumf %5, %6 : vector<16x64xf32>
    %c0_6 = arith.constant 0 : index
    %c0_7 = arith.constant 0 : index
    %8 = vector.load %arg4[%c0_6, %c0_7] : memref<64x32xf32, #tpu.memory_space<vmem>>, vector<64x32xf32>
    %cst_8 = arith.constant dense<0.000000e+00> : vector<16x32xf32>
    %9 = tpu.matmul %7, %8, %cst_8 {dimension_numbers = #tpu.dot_dimension_numbers<[1], [0], [0], [1], [0, 0, 1, 1], [], []>} : vector<16x64xf32>, vector<64x32xf32>, vector<16x32xf32> -> vector<16x32xf32>
    %c0_9 = arith.constant 0 : index
    %c0_10 = arith.constant 0 : index
    %10 = vector.load %arg5[%c0_9, %c0_10] : memref<1x32xf32, #tpu.memory_space<vmem>>, vector<1x32xf32>
    %11 = vector.broadcast %10 : vector<1x32xf32> to vector<16x32xf32>
    %12 = arith.addf %9, %11 : vector<16x32xf32>
    %c0_11 = arith.constant 0 : index
    %c0_12 = arith.constant 0 : index
    %13 = vector.load %arg6[%c0_11, %c0_12] : memref<16x32xf32, #tpu.memory_space<vmem>>, vector<16x32xf32>
    tpu.vector_store %arg6[%c0_11, %c0_12], %12 {strides = array<i32>} : memref<16x32xf32, #tpu.memory_space<vmem>>, vector<16x32xf32>,
    return
  }
  func.func @transform_0(%arg0: i32) -> (i32, i32) {
    %c0_i32 = arith.constant 0 : i32
    %c0_i32_0 = arith.constant 0 : i32
    return %arg0, %c0_i32 : i32, i32
  }
  func.func @transform_1(%arg0: i32) -> (i32, i32) {
    %c0_i32 = arith.constant 0 : i32
    %c0_i32_0 = arith.constant 0 : i32
    %c0_i32_1 = arith.constant 0 : i32
    return %c0_i32, %c0_i32_0 : i32, i32
  }
  func.func @transform_2(%arg0: i32) -> (i32, i32) {
    %c0_i32 = arith.constant 0 : i32
    %c0_i32_0 = arith.constant 0 : i32
    %c0_i32_1 = arith.constant 0 : i32
    return %c0_i32, %c0_i32_0 : i32, i32
  }
  func.func @transform_3(%arg0: i32) -> (i32, i32) {
    %c0_i32 = arith.constant 0 : i32
    %c0_i32_0 = arith.constant 0 : i32
    %c0_i32_1 = arith.constant 0 : i32
    return %c0_i32, %c0_i32_0 : i32, i32
  }
  func.func @transform_4(%arg0: i32) -> (i32, i32) {
    %c0_i32 = arith.constant 0 : i32
    %c0_i32_0 = arith.constant 0 : i32
    %c0_i32_1 = arith.constant 0 : i32
    return %c0_i32, %c0_i32_0 : i32, i32
  }
  func.func @transform_5(%arg0: i32) -> (i32, i32) {
    %c0_i32 = arith.constant 0 : i32
    %c0_i32_0 = arith.constant 0 : i32
    return %arg0, %c0_i32 : i32, i32
  }
}

</mosaic_0001>

<llo_original>
// kernel: tpu_custom_call.1
$region0: #{tpu_custom_call.1}
  #allocation0 [shape = 'u32[]', space=smem, size = 0x4, offset = 0x4, fixed_abs, tag = 'smem constant byte address 0x4 - core index']
  #allocation1 [shape = 'u32[144,128]{1,0:T(1,128)}', space=vmem, size = 0x12000, scoped, tag = 'internal scratch']
  %s0 = inlined_call_operand.vmem [shape: f32[16,32], index: 0, kind: input, shape index: {}]
  %s1 = inlined_call_operand.vmem [shape: f32[32,64], index: 1, kind: input, shape index: {}]
  %s2 = inlined_call_operand.vmem [shape: f32[1,64], index: 2, kind: input, shape index: {}]
  %s3 = inlined_call_operand.vmem [shape: f32[64,32], index: 3, kind: input, shape index: {}]
  %s4 = inlined_call_operand.vmem [shape: f32[1,32], index: 4, kind: input, shape index: {}]
  %s5 = inlined_call_operand.hbm [shape: f32[16,32], index: 5, kind: output, shape index: {}]
  %s6 = sld [smem:[#allocation0]]
  $region30: #{tpu_custom_call.1} parent=0
    _
  %s8 = ssub.s32 1, %s6
  %s9 = scalar_select 0, %s8, %s6
  $region1: #{tpu_custom_call.1} parent=0
    #allocation2 [shape = 'u8[8192]{0}', space=vmem, size = 0x2000, scoped, tag = 'output window, operand 0, single buffered']
    #allocation3 [shape = 's32[1]{0}', space=sflag, size = 0x4, scoped, tag = 'scoped memory for tpu_custom_call.1']
    %10 = vsyncpa [#allocation3], 0
    // Predicated region
    $region2: #{tpu_custom_call.1} parent=1 // pred_check
      _
    $region3: #{tpu_custom_call.1} parent=1 // pred_check_branch
      %12 = sbr.rel (0) target = $region5
    $region4: #{tpu_custom_call.1} parent=1 // pred_region
      _
    $region5: #{tpu_custom_call.1} parent=1 // pred_fallthru
      _
    // Predicated region
    $region6: #{tpu_custom_call.1} parent=1 // pred_check
      _
    $region7: #{tpu_custom_call.1} parent=1 // pred_check_branch
      %14 = sbr.rel (0) target = $region9
    $region8: #{tpu_custom_call.1} parent=1 // pred_region
      _
    $region9: #{tpu_custom_call.1} parent=1 // pred_fallthru
      _
    // Predicated region
    $region10: #{tpu_custom_call.1} parent=1 // pred_check
      _
    $region11: #{tpu_custom_call.1} parent=1 // pred_check_branch
      %16 = sbr.rel (0) target = $region13
    $region12: #{tpu_custom_call.1} parent=1 // pred_region
      _
    $region13: #{tpu_custom_call.1} parent=1 // pred_fallthru
      _
    // Predicated region
    $region14: #{tpu_custom_call.1} parent=1 // pred_check
      _
    $region15: #{tpu_custom_call.1} parent=1 // pred_check_branch
      %18 = sbr.rel (0) target = $region17
    $region16: #{tpu_custom_call.1} parent=1 // pred_region
      _
    $region17: #{tpu_custom_call.1} parent=1 // pred_fallthru
      _
    // Predicated region
    $region18: #{tpu_custom_call.1} parent=1 // pred_check
      _
    $region19: #{tpu_custom_call.1} parent=1 // pred_check_branch
      %20 = sbr.rel (0) target = $region21
    $region20: #{tpu_custom_call.1} parent=1 // pred_region
      _
    $region21: #{tpu_custom_call.1} parent=1 // pred_fallthru
      _
    %v21 = vld [vmem:[%s0] sm:$0xff]
    %v22 = vld [vmem:[%s0 + $0x8] sm:$0xff]
    %v23 = vld [vmem:[%s1] sm:$0xff]
    %v24 = vld [vmem:[%s1 + $0x8] sm:$0xff]
    %v25 = vld [vmem:[%s1 + $0x10] sm:$0xff]
    %v26 = vld [vmem:[%s1 + $0x18] sm:$0xff]
    %v27 = vld [vmem:[%s2] sm:$0x1]
    %v29 = vlaneseq
    %v30 = vshrl.u32 %v29, 7
    %v31 = vsub.s32 0, %v30
    %v32 = vrot.slane %v27, %v31
    %vm34 = vcmask 261120
    %v36 = vsel %vm34, %v21, 0
    %v39 = vsel %vm34, %v22, 0
    %41 = vmatprep.subr.mxu0 0.0
    %42 = vmatpush1.msra.mxu0 0.0
    %43 = vmatprep.subr.mxu0 0.0
    %44 = vmatpush1.msra.mxu0 0.0
    %45 = vmatprep.subr.mxu0 0.0
    %46 = vmatpush1.msra.mxu0 0.0
    %47 = vmatprep.subr.mxu0 0.0
    %48 = vmatpush1.msra.mxu0 0.0
    %49 = vmatprep.subr.mxu0 0.0
    %50 = vmatpush1.msra.mxu0 0.0
    %51 = vmatprep.subr.mxu0 0.0
    %52 = vmatpush1.msra.mxu0 0.0
    %53 = vmatprep.subr.mxu0 0.0
    %54 = vmatpush1.msra.mxu0 0.0
    %55 = vmatprep.subr.mxu0 0.0
    %56 = vmatpush1.msra.mxu0 0.0
    %57 = vmatprep.subr.mxu0 0.0
    %58 = vmatpush1.msra.mxu0 0.0
    %59 = vmatprep.subr.mxu0 0.0
    %60 = vmatpush1.msra.mxu0 0.0
    %61 = vmatprep.subr.mxu0 0.0
    %62 = vmatpush1.msra.mxu0 0.0
    %63 = vmatprep.subr.mxu0 0.0
    %64 = vmatpush1.msra.mxu0 0.0
    %65 = vmatprep.subr.mxu0 0.0
    %66 = vmatpush1.msra.mxu0 %v26
    %67 = vmatprep.subr.mxu0 0.0
    %68 = vmatpush1.msra.mxu0 %v25
    %69 = vmatprep.subr.mxu0 0.0
    %70 = vmatpush1.msra.mxu0 %v24
    %71 = vmatprep.subr.mxu0 0.0
    %72 = vmatpush1.msra.mxu0 %v23
    %73 = vmatprep.subr.mxu0 0.0
    %74 = vmatpush2.msra.mxu0 0.0
    %75 = vmatprep.subr.mxu0 0.0
    %76 = vmatpush2.msra.mxu0 0.0
    %77 = vmatprep.subr.mxu0 0.0
    %78 = vmatpush2.msra.mxu0 0.0
    %79 = vmatprep.subr.mxu0 0.0
    %80 = vmatpush2.msra.mxu0 0.0
    %81 = vmatprep.subr.mxu0 0.0
    %82 = vmatpush2.msra.mxu0 0.0
    %83 = vmatprep.subr.mxu0 0.0
    %84 = vmatpush2.msra.mxu0 0.0
    %85 = vmatprep.subr.mxu0 0.0
    %86 = vmatpush2.msra.mxu0 0.0
    %87 = vmatprep.subr.mxu0 0.0
    %88 = vmatpush2.msra.mxu0 0.0
    %89 = vmatprep.subr.mxu0 0.0
    %90 = vmatpush2.msra.mxu0 0.0
    %91 = vmatprep.subr.mxu0 0.0
    %92 = vmatpush2.msra.mxu0 0.0
    %93 = vmatprep.subr.mxu0 0.0
    %94 = vmatpush2.msra.mxu0 0.0
    %95 = vmatprep.subr.mxu0 0.0
    %96 = vmatpush2.msra.mxu0 0.0
    %97 = vmatprep.subr.mxu0 0.0
    %98 = vmatpush2.msra.mxu0 0.0
    %99 = vmatprep.subr.mxu0 0.0
    %100 = vmatpush2.msra.mxu0 0.0
    %101 = vmatprep.subr.mxu0 0.0
    %102 = vmatpush2.msra.mxu0 0.0
    %103 = vmatprep.subr.mxu0 0.0
    %104 = vmatpush2.msra.mxu0 0.0
    %105 = vmatprep.mubr.f32.mxu0 0.0
    %106 = vmatmul.mubr.f32.gmra.mxu0 %v36
    %v107 = vpop.f32.mrf.mxu0
    %v108 = vadd.f32 %v32, %v107
    %v109 = vpop.f32.mrf.mxu0
    %110 = vmatprep.mubr.f32.mxu0 0.0
    %111 = vmatmul.mubr.f32.gmra.mxu0 %v39
    %v112 = vpop.f32.mrf.mxu0
    %v113 = vadd.f32 %v32, %v112
    %v114 = vpop.f32.mrf.mxu0
    %115 = vdwg.mxu0
    %v116 = vmax.f32 %v108, 0.0
    %v117 = vmax.f32 %v113, 0.0
    %v118 = vld [vmem:[%s3] sm:$0xff]
    %v119 = vld [vmem:[%s3 + $0x8] sm:$0xff]
    %v120 = vld [vmem:[%s3 + $0x10] sm:$0xff]
    %v121 = vld [vmem:[%s3 + $0x18] sm:$0xff]
    %v122 = vld [vmem:[%s3 + $0x20] sm:$0xff]
    %v123 = vld [vmem:[%s3 + $0x28] sm:$0xff]
    %v124 = vld [vmem:[%s3 + $0x30] sm:$0xff]
    %v125 = vld [vmem:[%s3 + $0x38] sm:$0xff]
    %v126 = vld [vmem:[%s4] sm:$0x1]
    %v128 = vlaneseq
    %v129 = vshrl.u32 %v128, 7
    %v130 = vsub.s32 0, %v129
    %v131 = vrot.slane %v126, %v130
    %vm133 = vcmask 523264
    %v135 = vsel %vm133, %v116, 0
    %v138 = vsel %vm133, %v117, 0
    %140 = vmatprep.subr.mxu0 0.0
    %141 = vmatpush1.msra.mxu0 0.0
    %142 = vmatprep.subr.mxu0 0.0
    %143 = vmatpush1.msra.mxu0 0.0
    %144 = vmatprep.subr.mxu0 0.0
    %145 = vmatpush1.msra.mxu0 0.0
    %146 = vmatprep.subr.mxu0 0.0
    %147 = vmatpush1.msra.mxu0 0.0
    %148 = vmatprep.subr.mxu0 0.0
    %149 = vmatpush1.msra.mxu0 0.0
    %150 = vmatprep.subr.mxu0 0.0
    %151 = vmatpush1.msra.mxu0 0.0
    %152 = vmatprep.subr.mxu0 0.0
    %153 = vmatpush1.msra.mxu0 0.0
    %154 = vmatprep.subr.mxu0 0.0
    %155 = vmatpush1.msra.mxu0 0.0
    %156 = vmatprep.subr.mxu0 0.0
    %157 = vmatpush1.msra.mxu0 %v125
    %158 = vmatprep.subr.mxu0 0.0
    %159 = vmatpush1.msra.mxu0 %v124
    %160 = vmatprep.subr.mxu0 0.0
    %161 = vmatpush1.msra.mxu0 %v123
    %162 = vmatprep.subr.mxu0 0.0
    %163 = vmatpush1.msra.mxu0 %v122
    %164 = vmatprep.subr.mxu0 0.0
    %165 = vmatpush1.msra.mxu0 %v121
    %166 = vmatprep.subr.mxu0 0.0
    %167 = vmatpush1.msra.mxu0 %v120
    %168 = vmatprep.subr.mxu0 0.0
    %169 = vmatpush1.msra.mxu0 %v119
    %170 = vmatprep.subr.mxu0 0.0
    %171 = vmatpush1.msra.mxu0 %v118
    %172 = vmatprep.subr.mxu0 0.0
    %173 = vmatpush2.msra.mxu0 0.0
    %174 = vmatprep.subr.mxu0 0.0
    %175 = vmatpush2.msra.mxu0 0.0
    %176 = vmatprep.subr.mxu0 0.0
    %177 = vmatpush2.msra.mxu0 0.0
    %178 = vmatprep.subr.mxu0 0.0
    %179 = vmatpush2.msra.mxu0 0.0
    %180 = vmatprep.subr.mxu0 0.0
    %181 = vmatpush2.msra.mxu0 0.0
    %182 = vmatprep.subr.mxu0 0.0
    %183 = vmatpush2.msra.mxu0 0.0
    %184 = vmatprep.subr.mxu0 0.0
    %185 = vmatpush2.msra.mxu0 0.0
    %186 = vmatprep.subr.mxu0 0.0
    %187 = vmatpush2.msra.mxu0 0.0
    %188 = vmatprep.subr.mxu0 0.0
    %189 = vmatpush2.msra.mxu0 0.0
    %190 = vmatprep.subr.mxu0 0.0
    %191 = vmatpush2.msra.mxu0 0.0
    %192 = vmatprep.subr.mxu0 0.0
    %193 = vmatpush2.msra.mxu0 0.0
    %194 = vmatprep.subr.mxu0 0.0
    %195 = vmatpush2.msra.mxu0 0.0
    %196 = vmatprep.subr.mxu0 0.0
    %197 = vmatpush2.msra.mxu0 0.0
    %198 = vmatprep.subr.mxu0 0.0
    %199 = vmatpush2.msra.mxu0 0.0
    %200 = vmatprep.subr.mxu0 0.0
    %201 = vmatpush2.msra.mxu0 0.0
    %202 = vmatprep.subr.mxu0 0.0
    %203 = vmatpush2.msra.mxu0 0.0
    %204 = vmatprep.mubr.f32.mxu0 0.0
    %205 = vmatmul.mubr.f32.gmra.mxu0 %v135
    %v206 = vpop.f32.mrf.mxu0
    %v207 = vadd.f32 %v131, %v206
    %v208 = vpop.f32.mrf.mxu0
    %209 = vmatprep.mubr.f32.mxu0 0.0
    %210 = vmatmul.mubr.f32.gmra.mxu0 %v138
    %v211 = vpop.f32.mrf.mxu0
    %v212 = vadd.f32 %v131, %v211
    %v213 = vpop.f32.mrf.mxu0
    %214 = vdwg.mxu0
    %215 = vst.msk [vmem:[#allocation2] sm:$0xff] %vm34, %v207
    %216 = vst.msk [vmem:[#allocation2 + $0x8] sm:$0xff] %vm34, %v212
    // Predicated region
    $region22: #{tpu_custom_call.1} parent=1 // pred_check
      _
    $region23: #{tpu_custom_call.1} parent=1 // pred_check_branch
      %218 = sbr.rel (0) target = $region25
    $region24: #{tpu_custom_call.1} parent=1 // pred_region
      %s220 = ssub.s32 256, 256
      %221 = vsyncadd [#allocation3], %s220
      %s222 = sshll.u32 [#allocation2], 4
      %s223 = int_to_ptr.vmem [resolvable:$true] %s222
      %228 = dma.vmem_to_hbm [thread:$0]  %s223, 256, %s5, [#allocation3], 128, 128, 8
    $region25: #{tpu_custom_call.1} parent=1 // pred_fallthru
      _
    // Predicated region
    $region26: #{tpu_custom_call.1} parent=1 // pred_check
      _
    $region27: #{tpu_custom_call.1} parent=1 // pred_check_branch
      %230 = sbr.rel (0) target = $region29
    $region28: #{tpu_custom_call.1} parent=1 // pred_region
      %231 = dma.done [#allocation3], 256
    $region29: #{tpu_custom_call.1} parent=1 // pred_fallthru
      _
    %232 = vsyncpa [#allocation3], 1

</llo_original>
